<compile_context>
chip_gen: v7x
topology: tpu7x:2x2x1
jax: 0.10.0
libtpu: 0.0.40
codegen_flags: <defaults>
</compile_context>

<pallas_src>
import functools

import jax
import jax.numpy as jnp
from jax.experimental import pallas as pl
from jax.experimental.pallas import tpu as pltpu


def _round_up(x, m):
    return (x + m - 1) // m * m


def _tpu_budget():
    """Returns (usable VMEM budget in bytes, is-multi-TensorCore-chip)."""
    cap = None
    try:
        cap = int(pltpu.get_tpu_info().vmem_capacity_bytes)
    except Exception:
        cap = None
    if cap is None or cap <= 0:
        cap = 64 << 20                       # conservative default (v7x per-TC)
    multi_tc = cap <= (64 << 20)             # v7x: 64 MiB per TC, 2 TCs / chip
    try:
        kind = jax.devices()[0].device_kind.lower()
        if ("7" in kind) or ("v4" in kind) or ("v5p" in kind):
            multi_tc = True
    except Exception:
        pass
    # Leave ~18% headroom for compiler-internal scratch / semaphores.
    return int(cap * 0.82), multi_tc


def _choose_tiles(M, Dp, x_item, w_item, o_item, budget, multi_tc):
    """Pick (tm, tk, footprint).  Prefer a fully resident (single K step) weight;
    otherwise stream the weight over K with the biggest row tile that fits."""
    affine = 3 * 8 * Dp * 4                  # (1, Dp) f32 blocks, sublane-padded

    tm_cap = max(8, _round_up(M, 8))
    if multi_tc and M > 32:
        # Keep >= 4 row steps so both TensorCores get pipelined work.
        tm_cap = min(tm_cap, max(8, _round_up(-(-M // 4), 8)))
    cands = [t for t in (1024, 512, 256, 128, 64, 32, 16, 8) if t <= tm_cap]
    if tm_cap not in cands:
        cands.append(tm_cap)
    cands = sorted(set(cands), reverse=True)

    def footprint(tm, tk, w_bufs):
        return (w_bufs * tk * Dp * w_item    # weight block(s)
                + 2 * tm * tk * x_item       # x tile (double buffered)
                + 2 * tm * Dp * o_item       # out tile (double buffered)
                + tm * Dp * 4                # f32 accumulator scratch
                + affine)                    # bias / gamma / beta (single buf)

    # Resident-weight regime: single K step, single-buffered weight.
    for tm in cands:
        need = footprint(tm, Dp, 1)
        if need <= budget:
            return tm, Dp, need

    # K-streamed regime: 128-aligned slabs (prefer 512/256 for the 256x MXUs),
    # double-buffered weight; grow tm as large as the budget allows to cut
    # weight re-reads from HBM.
    tk = next(t for t in (512, 256, 128) if Dp % t == 0)
    for tm in cands:
        need = footprint(tm, tk, 2)
        if need <= budget:
            return tm, tk, need
    return 8, 128, footprint(8, 128, 2)


def _postnorm_kernel(x_ref, w_ref, b_ref, gamma_ref, beta_ref, o_ref, acc_ref,
                     *, d_true):
    k = pl.program_id(1)

    # Fold the Linear bias into the accumulator init (the init write happens
    # anyway, so the epilogue add is free to remove).
    @pl.when(k == 0)
    def _():
        acc_ref[...] = jnp.broadcast_to(b_ref[...], acc_ref.shape)

    # MXU matmul in the operands' native dtype, f32 accumulation.
    acc_ref[...] += jnp.dot(x_ref[...], w_ref[...],
                            preferred_element_type=jnp.float32)

    @pl.when(k == pl.num_programs(1) - 1)
    def _():
        y = acc_ref[...]                                   # (tm, Dp) f32
        d_pad = y.shape[-1]
        inv_d = 1.0 / d_true
        # Padded feature columns of y are exactly zero (zero weight columns,
        # zero bias), so the row-sum over Dp equals the sum over the true D.
        mean = jnp.sum(y, axis=-1, keepdims=True) * inv_d
        yc = y - mean
        if d_pad != d_true:                                # static branch
            col = jax.lax.broadcasted_iota(jnp.int32, y.shape, 1)
            yc = jnp.where(col < d_true, yc, 0.0)
        # Two-pass (centered) variance: matches PyTorch LayerNorm numerics.
        var = jnp.sum(yc * yc, axis=-1, keepdims=True) * inv_d
        inv = jax.lax.rsqrt(var + 1e-5)                    # PyTorch default eps
        o_ref[...] = (yc * inv * gamma_ref[...]
                      + beta_ref[...]).astype(o_ref.dtype)


def post_norm(x, w, b, gamma, beta, *, matmul_dtype=None):
    """x: (batch, seq, dim).  Returns LayerNorm(x @ w + b) with affine gamma/beta.

    matmul_dtype: optional dtype (e.g. jnp.bfloat16) for the MXU operands;
    accumulation and the LayerNorm epilogue stay f32.
    """
    B, S, D = x.shape
    M = B * S
    Dp = _round_up(D, 128)                   # lane-dense feature dim

    x_item = jnp.dtype(x.dtype).itemsize
    w_item = jnp.dtype(w.dtype).itemsize
    o_item = jnp.dtype(x.dtype).itemsize
    if matmul_dtype is not None:
        x_item = w_item = jnp.dtype(matmul_dtype).itemsize

    budget, multi_tc = _tpu_budget()
    tm, tk, vmem_need = _choose_tiles(M, Dp, x_item, w_item, o_item, budget,
                                      multi_tc)
    n_k = Dp // tk
    n_rows = pl.cdiv(M, tm)

    # Only the feature dim is zero-padded (one extra HBM pass only when
    # D % 128 != 0).  Ragged row tiles are handled by Pallas' masked partial
    # blocks - no wrapper-side row padding or row slicing.
    x2 = x.reshape(M, D)
    if Dp != D:
        x2 = jnp.pad(x2, ((0, 0), (0, Dp - D)))
        w2 = jnp.pad(w, ((0, Dp - D), (0, Dp - D)))
    else:
        w2 = w
    if matmul_dtype is not None:
        x2 = x2.astype(matmul_dtype)
        w2 = w2.astype(matmul_dtype)
    b2 = jnp.pad(b.astype(jnp.float32), (0, Dp - D)).reshape(1, Dp)
    g2 = jnp.pad(gamma.astype(jnp.float32), (0, Dp - D)).reshape(1, Dp)
    bt2 = jnp.pad(beta.astype(jnp.float32), (0, Dp - D)).reshape(1, Dp)

    vmem_limit = int(min(budget, max(int(vmem_need * 1.2) + (2 << 20),
                                     24 << 20)))
    kernel = functools.partial(_postnorm_kernel, d_true=D)

    def _run(single_buffer_consts):
        def const_spec(shape, imap):
            if single_buffer_consts:
                return pl.BlockSpec(shape, imap, pipeline_mode=pl.Buffered(1))
            return pl.BlockSpec(shape, imap)

        if n_k == 1:
            # Weight index never changes -> single buffer (halves resident VMEM).
            w_spec = const_spec((tk, Dp), lambda i, k: (k, 0))
        else:
            w_spec = pl.BlockSpec((tk, Dp), lambda i, k: (k, 0))

        return pl.pallas_call(
            kernel,
            out_shape=jax.ShapeDtypeStruct((M, Dp), x.dtype),
            grid_spec=pltpu.PrefetchScalarGridSpec(
                num_scalar_prefetch=0,
                grid=(n_rows, n_k),
                in_specs=[
                    pl.BlockSpec((tm, tk), lambda i, k: (i, k)),   # x rows
                    w_spec,                                        # weight slab
                    const_spec((1, Dp), lambda i, k: (0, 0)),      # bias (f32)
                    const_spec((1, Dp), lambda i, k: (0, 0)),      # gamma (f32)
                    const_spec((1, Dp), lambda i, k: (0, 0)),      # beta (f32)
                ],
                out_specs=pl.BlockSpec((tm, Dp), lambda i, k: (i, 0)),
                scratch_shapes=[pltpu.VMEM((tm, Dp), jnp.float32)],
            ),
            compiler_params=pltpu.CompilerParams(
                # Row axis sharded across TensorCores (megacore / v7x);
                # K reduction axis last and "arbitrary".
                dimension_semantics=("parallel", "arbitrary"),
                vmem_limit_bytes=vmem_limit,
            ),
        )(x2, w2, b2, g2, bt2)

    try:
        out = _run(True)
    except Exception:
        # Fallback for jax versions without pipeline_mode / Buffered(1) support.
        out = _run(False)

    out = out if Dp == D else out[:, :D]
    return out.reshape(B, S, D)


def post_norm_ref(x, w, b, gamma, beta):
    y = jnp.einsum("bsd,de->bse", x, w) + b
    mean = jnp.mean(y, axis=-1, keepdims=True)
    var = jnp.mean((y - mean) ** 2, axis=-1, keepdims=True)
    return (y - mean) / jnp.sqrt(var + 1e-5) * gamma + beta


if __name__ == "__main__":
    key = jax.random.PRNGKey(0)
    k_x, k_w, k_b, k_x2 = jax.random.split(key, 4)

    batch, seq, dim = 2, 8, 32

    x = jax.random.normal(k_x, (batch, seq, dim), dtype=jnp.float32)
    # fn = Linear(dim, dim) parameters (deterministic synthetic init)
    w = jax.random.normal(k_w, (dim, dim), dtype=jnp.float32) * (1.0 / dim ** 0.5)
    b = jax.random.normal(k_b, (dim,), dtype=jnp.float32) * 0.01
    # LayerNorm affine params (PyTorch default init: ones / zeros)
    gamma = jnp.ones((dim,), dtype=jnp.float32)
    beta = jnp.zeros((dim,), dtype=jnp.float32)

    out = jax.block_until_ready(post_norm(x, w, b, gamma, beta))
    ref = post_norm_ref(x, w, b, gamma, beta)
    assert out.shape == (batch, seq, dim)
    assert jnp.allclose(out, ref, atol=1e-4, rtol=1e-4), float(
        jnp.max(jnp.abs(out - ref)))

    # Ragged row count (M not a multiple of the tile) exercises the masked
    # partial row-tile path (no wrapper-side row padding).
    x_r = jax.random.normal(k_x2, (2, 7, dim), dtype=jnp.float32)
    out_r = jax.block_until_ready(post_norm(x_r, w, b, gamma, beta))
    ref_r = post_norm_ref(x_r, w, b, gamma, beta)
    assert out_r.shape == (2, 7, dim)
    assert jnp.allclose(out_r, ref_r, atol=1e-4, rtol=1e-4), float(
        jnp.max(jnp.abs(out_r - ref_r)))

    print("KERNEL_OK")
</pallas_src>

<mosaic_0001>
module attributes {stable_mosaic.version = 11 : i64} {
  func.func @_postnorm_kernel(%arg0: i32, %arg1: i32, %arg2: memref<16x128xf32, #tpu.memory_space<vmem>>, %arg3: memref<128x128xf32, #tpu.memory_space<vmem>>, %arg4: memref<1x128xf32, #tpu.memory_space<vmem>>, %arg5: memref<1x128xf32, #tpu.memory_space<vmem>>, %arg6: memref<1x128xf32, #tpu.memory_space<vmem>>, %arg7: memref<16x128xf32, #tpu.memory_space<vmem>>, %arg8: memref<16x128xf32, #tpu.memory_space<vmem>>) attributes {dimension_semantics = [#tpu.dimension_semantics<parallel>, #tpu.dimension_semantics<arbitrary>], iteration_bounds = array<i64: 1, 1>, scalar_prefetch = 0 : i64, scratch_operands = 1 : i64, tpu.core_type = #tpu.core_type<tc>, window_params = [{transform_indices = @transform_0, window_bounds = array<i64: 16, 128>}, {pipeline_mode = #tpu.pipeline_mode<synchronous>, transform_indices = @transform_1, window_bounds = array<i64: 128, 128>}, {pipeline_mode = #tpu.pipeline_mode<synchronous>, transform_indices = @transform_2, window_bounds = array<i64: 1, 128>}, {pipeline_mode = #tpu.pipeline_mode<synchronous>, transform_indices = @transform_3, window_bounds = array<i64: 1, 128>}, {pipeline_mode = #tpu.pipeline_mode<synchronous>, transform_indices = @transform_4, window_bounds = array<i64: 1, 128>}, {transform_indices = @transform_5, window_bounds = array<i64: 16, 128>}]} {
    %c0_i32 = arith.constant 0 : i32
    %0 = arith.cmpi eq, %arg1, %c0_i32 : i32
    %1 = arith.extui %0 : i1 to i32
    %c0_i32_0 = arith.constant 0 : i32
    %2 = arith.cmpi ne, %1, %c0_i32_0 : i32
    scf.if %2 {
      %c0_10 = arith.constant 0 : index
      %c0_11 = arith.constant 0 : index
      %12 = vector.load %arg4[%c0_10, %c0_11] : memref<1x128xf32, #tpu.memory_space<vmem>>, vector<1x128xf32>
      %13 = vector.shape_cast %12 : vector<1x128xf32> to vector<1x128xf32>
      %14 = vector.broadcast %13 : vector<1x128xf32> to vector<16x128xf32>
      %c0_12 = arith.constant 0 : index
      %c0_13 = arith.constant 0 : index
      %15 = vector.load %arg8[%c0_12, %c0_13] : memref<16x128xf32, #tpu.memory_space<vmem>>, vector<16x128xf32>
      tpu.vector_store %arg8[%c0_12, %c0_13], %14 {strides = array<i32>} : memref<16x128xf32, #tpu.memory_space<vmem>>, vector<16x128xf32>,
    } else {
    }
    %c0 = arith.constant 0 : index
    %c0_1 = arith.constant 0 : index
    %3 = vector.load %arg8[%c0, %c0_1] : memref<16x128xf32, #tpu.memory_space<vmem>>, vector<16x128xf32>
    %c0_2 = arith.constant 0 : index
    %c0_3 = arith.constant 0 : index
    %4 = vector.load %arg2[%c0_2, %c0_3] : memref<16x128xf32, #tpu.memory_space<vmem>>, vector<16x128xf32>
    %c0_4 = arith.constant 0 : index
    %c0_5 = arith.constant 0 : index
    %5 = vector.load %arg3[%c0_4, %c0_5] : memref<128x128xf32, #tpu.memory_space<vmem>>, vector<128x128xf32>
    %cst = arith.constant dense<0.000000e+00> : vector<16x128xf32>
    %6 = tpu.matmul %4, %5, %cst {dimension_numbers = #tpu.dot_dimension_numbers<[1], [0], [0], [1], [0, 0, 1, 1], [], []>} : vector<16x128xf32>, vector<128x128xf32>, vector<16x128xf32> -> vector<16x128xf32>
    %7 = arith.addf %3, %6 : vector<16x128xf32>
    %c0_6 = arith.constant 0 : index
    %c0_7 = arith.constant 0 : index
    %8 = vector.load %arg8[%c0_6, %c0_7] : memref<16x128xf32, #tpu.memory_space<vmem>>, vector<16x128xf32>
    tpu.vector_store %arg8[%c0_6, %c0_7], %7 {strides = array<i32>} : memref<16x128xf32, #tpu.memory_space<vmem>>, vector<16x128xf32>,
    %c0_i32_8 = arith.constant 0 : i32
    %9 = arith.cmpi eq, %arg1, %c0_i32_8 : i32
    %10 = arith.extui %9 : i1 to i32
    %c0_i32_9 = arith.constant 0 : i32
    %11 = arith.cmpi ne, %10, %c0_i32_9 : i32
    scf.if %11 {
      %c0_10 = arith.constant 0 : index
      %c0_11 = arith.constant 0 : index
      %12 = vector.load %arg8[%c0_10, %c0_11] : memref<16x128xf32, #tpu.memory_space<vmem>>, vector<16x128xf32>
      %cst_12 = arith.constant dense<0.000000e+00> : vector<16xf32>
      %13 = vector.multi_reduction <add>, %12, %cst_12 [1] : vector<16x128xf32> to vector<16xf32>
      %14 = vector.shape_cast %13 : vector<16xf32> to vector<16x1xf32>
      %cst_13 = arith.constant 3.125000e-02 : f32
      %15 = vector.broadcast %cst_13 : f32 to vector<16x1xf32>
      %16 = arith.mulf %14, %15 : vector<16x1xf32>
      %17 = vector.broadcast %16 : vector<16x1xf32> to vector<16x128xf32>
      %18 = arith.subf %12, %17 : vector<16x128xf32>
      %19 = tpu.iota {dimensions = array<i32: 1>} : vector<16x128xi32>
      %c32_i32 = arith.constant 32 : i32
      %20 = vector.broadcast %c32_i32 : i32 to vector<16x128xi32>
      %21 = arith.cmpi slt, %19, %20 : vector<16x128xi32>
      %cst_14 = arith.constant 0.000000e+00 : f32
      %22 = vector.broadcast %cst_14 : f32 to vector<16x128xf32>
      %23 = arith.select %21, %18, %22 : vector<16x128xi1>, vector<16x128xf32>
      %24 = arith.mulf %23, %23 : vector<16x128xf32>
      %cst_15 = arith.constant dense<0.000000e+00> : vector<16xf32>
      %25 = vector.multi_reduction <add>, %24, %cst_15 [1] : vector<16x128xf32> to vector<16xf32>
      %26 = vector.shape_cast %25 : vector<16xf32> to vector<16x1xf32>
      %cst_16 = arith.constant 3.125000e-02 : f32
      %27 = vector.broadcast %cst_16 : f32 to vector<16x1xf32>
      %28 = arith.mulf %26, %27 : vector<16x1xf32>
      %cst_17 = arith.constant 9.99999974E-6 : f32
      %29 = vector.broadcast %cst_17 : f32 to vector<16x1xf32>
      %30 = arith.addf %28, %29 : vector<16x1xf32>
      %31 = math.rsqrt %30 : vector<16x1xf32>
      %32 = vector.broadcast %31 : vector<16x1xf32> to vector<16x128xf32>
      %33 = arith.mulf %23, %32 : vector<16x128xf32>
      %c0_18 = arith.constant 0 : index
      %c0_19 = arith.constant 0 : index
      %34 = vector.load %arg5[%c0_18, %c0_19] : memref<1x128xf32, #tpu.memory_space<vmem>>, vector<1x128xf32>
      %35 = vector.broadcast %34 : vector<1x128xf32> to vector<16x128xf32>
      %36 = arith.mulf %33, %35 : vector<16x128xf32>
      %c0_20 = arith.constant 0 : index
      %c0_21 = arith.constant 0 : index
      %37 = vector.load %arg6[%c0_20, %c0_21] : memref<1x128xf32, #tpu.memory_space<vmem>>, vector<1x128xf32>
      %38 = vector.broadcast %37 : vector<1x128xf32> to vector<16x128xf32>
      %39 = arith.addf %36, %38 : vector<16x128xf32>
      %c0_22 = arith.constant 0 : index
      %c0_23 = arith.constant 0 : index
      %40 = vector.load %arg7[%c0_22, %c0_23] : memref<16x128xf32, #tpu.memory_space<vmem>>, vector<16x128xf32>
      tpu.vector_store %arg7[%c0_22, %c0_23], %39 {strides = array<i32>} : memref<16x128xf32, #tpu.memory_space<vmem>>, vector<16x128xf32>,
    } else {
    }
    return
  }
  func.func @transform_0(%arg0: i32, %arg1: i32) -> (i32, i32) {
    %c0_i32 = arith.constant 0 : i32
    return %arg0, %arg1 : i32, i32
  }
  func.func @transform_1(%arg0: i32, %arg1: i32) -> (i32, i32) {
    %c0_i32 = arith.constant 0 : i32
    %c0_i32_0 = arith.constant 0 : i32
    return %arg1, %c0_i32 : i32, i32
  }
  func.func @transform_2(%arg0: i32, %arg1: i32) -> (i32, i32) {
    %c0_i32 = arith.constant 0 : i32
    %c0_i32_0 = arith.constant 0 : i32
    %c0_i32_1 = arith.constant 0 : i32
    return %c0_i32, %c0_i32_0 : i32, i32
  }
  func.func @transform_3(%arg0: i32, %arg1: i32) -> (i32, i32) {
    %c0_i32 = arith.constant 0 : i32
    %c0_i32_0 = arith.constant 0 : i32
    %c0_i32_1 = arith.constant 0 : i32
    return %c0_i32, %c0_i32_0 : i32, i32
  }
  func.func @transform_4(%arg0: i32, %arg1: i32) -> (i32, i32) {
    %c0_i32 = arith.constant 0 : i32
    %c0_i32_0 = arith.constant 0 : i32
    %c0_i32_1 = arith.constant 0 : i32
    return %c0_i32, %c0_i32_0 : i32, i32
  }
  func.func @transform_5(%arg0: i32, %arg1: i32) -> (i32, i32) {
    %c0_i32 = arith.constant 0 : i32
    %c0_i32_0 = arith.constant 0 : i32
    return %arg0, %c0_i32 : i32, i32
  }
}

module attributes {stable_mosaic.version = 11 : i64} {
  func.func @_postnorm_kernel(%arg0: i32, %arg1: i32, %arg2: memref<16x128xf32, #tpu.memory_space<vmem>>, %arg3: memref<128x128xf32, #tpu.memory_space<vmem>>, %arg4: memref<1x128xf32, #tpu.memory_space<vmem>>, %arg5: memref<1x128xf32, #tpu.memory_space<vmem>>, %arg6: memref<1x128xf32, #tpu.memory_space<vmem>>, %arg7: memref<16x128xf32, #tpu.memory_space<vmem>>, %arg8: memref<16x128xf32, #tpu.memory_space<vmem>>) attributes {dimension_semantics = [#tpu.dimension_semantics<parallel>, #tpu.dimension_semantics<arbitrary>], iteration_bounds = array<i64: 1, 1>, scalar_prefetch = 0 : i64, scratch_operands = 1 : i64, tpu.core_type = #tpu.core_type<tc>, window_params = [{transform_indices = @transform_0, window_bounds = array<i64: 16, 128>}, {transform_indices = @transform_1, window_bounds = array<i64: 128, 128>}, {pipeline_mode = #tpu.pipeline_mode<synchronous>, transform_indices = @transform_2, window_bounds = array<i64: 1, 128>}, {pipeline_mode = #tpu.pipeline_mode<synchronous>, transform_indices = @transform_3, window_bounds = array<i64: 1, 128>}, {pipeline_mode = #tpu.pipeline_mode<synchronous>, transform_indices = @transform_4, window_bounds = array<i64: 1, 128>}, {transform_indices = @transform_5, window_bounds = array<i64: 16, 128>}]} {
    %c0_i32 = arith.constant 0 : i32
    %0 = arith.cmpi eq, %arg1, %c0_i32 : i32
    %1 = arith.extui %0 : i1 to i32
    %c0_i32_0 = arith.constant 0 : i32
    %2 = arith.cmpi ne, %1, %c0_i32_0 : i32
    scf.if %2 {
      %c0_10 = arith.constant 0 : index
      %c0_11 = arith.constant 0 : index
      %12 = vector.load %arg4[%c0_10, %c0_11] : memref<1x128xf32, #tpu.memory_space<vmem>>, vector<1x128xf32>
      %13 = vector.shape_cast %12 : vector<1x128xf32> to vector<1x128xf32>
      %14 = vector.broadcast %13 : vector<1x128xf32> to vector<16x128xf32>
      %c0_12 = arith.constant 0 : index
      %c0_13 = arith.constant 0 : index
      %15 = vector.load %arg8[%c0_12, %c0_13] : memref<16x128xf32, #tpu.memory_space<vmem>>, vector<16x128xf32>
      tpu.vector_store %arg8[%c0_12, %c0_13], %14 {strides = array<i32>} : memref<16x128xf32, #tpu.memory_space<vmem>>, vector<16x128xf32>,
    } else {
    }
    %c0 = arith.constant 0 : index
    %c0_1 = arith.constant 0 : index
    %3 = vector.load %arg8[%c0, %c0_1] : memref<16x128xf32, #tpu.memory_space<vmem>>, vector<16x128xf32>
    %c0_2 = arith.constant 0 : index
    %c0_3 = arith.constant 0 : index
    %4 = vector.load %arg2[%c0_2, %c0_3] : memref<16x128xf32, #tpu.memory_space<vmem>>, vector<16x128xf32>
    %c0_4 = arith.constant 0 : index
    %c0_5 = arith.constant 0 : index
    %5 = vector.load %arg3[%c0_4, %c0_5] : memref<128x128xf32, #tpu.memory_space<vmem>>, vector<128x128xf32>
    %cst = arith.constant dense<0.000000e+00> : vector<16x128xf32>
    %6 = tpu.matmul %4, %5, %cst {dimension_numbers = #tpu.dot_dimension_numbers<[1], [0], [0], [1], [0, 0, 1, 1], [], []>} : vector<16x128xf32>, vector<128x128xf32>, vector<16x128xf32> -> vector<16x128xf32>
    %7 = arith.addf %3, %6 : vector<16x128xf32>
    %c0_6 = arith.constant 0 : index
    %c0_7 = arith.constant 0 : index
    %8 = vector.load %arg8[%c0_6, %c0_7] : memref<16x128xf32, #tpu.memory_space<vmem>>, vector<16x128xf32>
    tpu.vector_store %arg8[%c0_6, %c0_7], %7 {strides = array<i32>} : memref<16x128xf32, #tpu.memory_space<vmem>>, vector<16x128xf32>,
    %c0_i32_8 = arith.constant 0 : i32
    %9 = arith.cmpi eq, %arg1, %c0_i32_8 : i32
    %10 = arith.extui %9 : i1 to i32
    %c0_i32_9 = arith.constant 0 : i32
    %11 = arith.cmpi ne, %10, %c0_i32_9 : i32
    scf.if %11 {
      %c0_10 = arith.constant 0 : index
      %c0_11 = arith.constant 0 : index
      %12 = vector.load %arg8[%c0_10, %c0_11] : memref<16x128xf32, #tpu.memory_space<vmem>>, vector<16x128xf32>
      %cst_12 = arith.constant dense<0.000000e+00> : vector<16xf32>
      %13 = vector.multi_reduction <add>, %12, %cst_12 [1] : vector<16x128xf32> to vector<16xf32>
      %14 = vector.shape_cast %13 : vector<16xf32> to vector<16x1xf32>
      %cst_13 = arith.constant 3.125000e-02 : f32
      %15 = vector.broadcast %cst_13 : f32 to vector<16x1xf32>
      %16 = arith.mulf %14, %15 : vector<16x1xf32>
      %17 = vector.broadcast %16 : vector<16x1xf32> to vector<16x128xf32>
      %18 = arith.subf %12, %17 : vector<16x128xf32>
      %19 = tpu.iota {dimensions = array<i32: 1>} : vector<16x128xi32>
      %c32_i32 = arith.constant 32 : i32
      %20 = vector.broadcast %c32_i32 : i32 to vector<16x128xi32>
      %21 = arith.cmpi slt, %19, %20 : vector<16x128xi32>
      %cst_14 = arith.constant 0.000000e+00 : f32
      %22 = vector.broadcast %cst_14 : f32 to vector<16x128xf32>
      %23 = arith.select %21, %18, %22 : vector<16x128xi1>, vector<16x128xf32>
      %24 = arith.mulf %23, %23 : vector<16x128xf32>
      %cst_15 = arith.constant dense<0.000000e+00> : vector<16xf32>
      %25 = vector.multi_reduction <add>, %24, %cst_15 [1] : vector<16x128xf32> to vector<16xf32>
      %26 = vector.shape_cast %25 : vector<16xf32> to vector<16x1xf32>
      %cst_16 = arith.constant 3.125000e-02 : f32
      %27 = vector.broadcast %cst_16 : f32 to vector<16x1xf32>
      %28 = arith.mulf %26, %27 : vector<16x1xf32>
      %cst_17 = arith.constant 9.99999974E-6 : f32
      %29 = vector.broadcast %cst_17 : f32 to vector<16x1xf32>
      %30 = arith.addf %28, %29 : vector<16x1xf32>
      %31 = math.rsqrt %30 : vector<16x1xf32>
      %32 = vector.broadcast %31 : vector<16x1xf32> to vector<16x128xf32>
      %33 = arith.mulf %23, %32 : vector<16x128xf32>
      %c0_18 = arith.constant 0 : index
      %c0_19 = arith.constant 0 : index
      %34 = vector.load %arg5[%c0_18, %c0_19] : memref<1x128xf32, #tpu.memory_space<vmem>>, vector<1x128xf32>
      %35 = vector.broadcast %34 : vector<1x128xf32> to vector<16x128xf32>
      %36 = arith.mulf %33, %35 : vector<16x128xf32>
      %c0_20 = arith.constant 0 : index
      %c0_21 = arith.constant 0 : index
      %37 = vector.load %arg6[%c0_20, %c0_21] : memref<1x128xf32, #tpu.memory_space<vmem>>, vector<1x128xf32>
      %38 = vector.broadcast %37 : vector<1x128xf32> to vector<16x128xf32>
      %39 = arith.addf %36, %38 : vector<16x128xf32>
      %c0_22 = arith.constant 0 : index
      %c0_23 = arith.constant 0 : index
      %40 = vector.load %arg7[%c0_22, %c0_23] : memref<16x128xf32, #tpu.memory_space<vmem>>, vector<16x128xf32>
      tpu.vector_store %arg7[%c0_22, %c0_23], %39 {strides = array<i32>} : memref<16x128xf32, #tpu.memory_space<vmem>>, vector<16x128xf32>,
    } else {
    }
    return
  }
  func.func @transform_0(%arg0: i32, %arg1: i32) -> (i32, i32) {
    %c0_i32 = arith.constant 0 : i32
    return %arg0, %arg1 : i32, i32
  }
  func.func @transform_1(%arg0: i32, %arg1: i32) -> (i32, i32) {
    %c0_i32 = arith.constant 0 : i32
    %c0_i32_0 = arith.constant 0 : i32
    return %arg1, %c0_i32 : i32, i32
  }
  func.func @transform_2(%arg0: i32, %arg1: i32) -> (i32, i32) {
    %c0_i32 = arith.constant 0 : i32
    %c0_i32_0 = arith.constant 0 : i32
    %c0_i32_1 = arith.constant 0 : i32
    return %c0_i32, %c0_i32_0 : i32, i32
  }
  func.func @transform_3(%arg0: i32, %arg1: i32) -> (i32, i32) {
    %c0_i32 = arith.constant 0 : i32
    %c0_i32_0 = arith.constant 0 : i32
    %c0_i32_1 = arith.constant 0 : i32
    return %c0_i32, %c0_i32_0 : i32, i32
  }
  func.func @transform_4(%arg0: i32, %arg1: i32) -> (i32, i32) {
    %c0_i32 = arith.constant 0 : i32
    %c0_i32_0 = arith.constant 0 : i32
    %c0_i32_1 = arith.constant 0 : i32
    return %c0_i32, %c0_i32_0 : i32, i32
  }
  func.func @transform_5(%arg0: i32, %arg1: i32) -> (i32, i32) {
    %c0_i32 = arith.constant 0 : i32
    %c0_i32_0 = arith.constant 0 : i32
    return %arg0, %c0_i32 : i32, i32
  }
}

</mosaic_0001>

<llo_original>
// kernel: tpu_custom_call.1
$region0: #{tpu_custom_call.1}
  #allocation0 [shape = 'u32[]', space=smem, size = 0x4, offset = 0x4, fixed_abs, tag = 'smem constant byte address 0x4 - core index']
  #allocation1 [shape = 'u32[144,128]{1,0:T(1,128)}', space=vmem, size = 0x12000, scoped, tag = 'internal scratch']
  #allocation2 [shape = 'f32[16,128]{1,0:T(8,128)}', space=vmem, size = 0x2000, scoped, tag = 'scratch operand']
  %s0 = inlined_call_operand.hbm [shape: f32[16,128], index: 0, kind: input, shape index: {}]
  %s1 = inlined_call_operand.hbm [shape: f32[128,128], index: 1, kind: input, shape index: {}]
  %s2 = inlined_call_operand.vmem [shape: f32[1,128], index: 2, kind: input, shape index: {}]
  %s3 = inlined_call_operand.vmem [shape: f32[1,128], index: 3, kind: input, shape index: {}]
  %s4 = inlined_call_operand.vmem [shape: f32[1,128], index: 4, kind: input, shape index: {}]
  %s5 = inlined_call_operand.hbm [shape: f32[16,128], index: 5, kind: output, shape index: {}]
  %s6 = sld [smem:[#allocation0]]
  $region46: #{tpu_custom_call.1} parent=0
    _
  %s8 = ssub.s32 1, %s6
  %s9 = scalar_select 0, %s8, %s6
  $region1: #{tpu_custom_call.1} parent=0
    #allocation3 [shape = 'u8[8192]{0}', space=vmem, size = 0x2000, scoped, tag = 'input window, operand 0, single buffered']
    #allocation4 [shape = 's32[1]{0}', space=sflag, size = 0x4, scoped, tag = 'scoped memory for tpu_custom_call.1']
    #allocation5 [shape = 's32[1]{0}', space=sflag, size = 0x4, scoped, tag = 'scoped memory for tpu_custom_call.1']
    #allocation6 [shape = 'u8[65536]{0}', space=vmem, size = 0x10000, scoped, tag = 'input window, operand 1, single buffered']
    #allocation7 [shape = 's32[1]{0}', space=sflag, size = 0x4, scoped, tag = 'scoped memory for tpu_custom_call.1']
    #allocation8 [shape = 'u8[8192]{0}', space=vmem, size = 0x2000, scoped, tag = 'output window, operand 0, single buffered']
    %10 = vsyncpa [#allocation4], 0
    %11 = vsyncpa [#allocation7], 0
    %12 = vsyncpa [#allocation5], 0
    // Predicated region
    $region2: #{tpu_custom_call.1} parent=1 // pred_check
      _
    $region3: #{tpu_custom_call.1} parent=1 // pred_check_branch
      %14 = sbr.rel (0) target = $region5
    $region4: #{tpu_custom_call.1} parent=1 // pred_region
      %s16 = ssub.s32 256, 256
      %17 = vsyncadd [#allocation4], %s16
      %s18 = sshll.u32 [#allocation3], 4
      %s19 = int_to_ptr.vmem [resolvable:$true] %s18
      %24 = dma.hbm_to_vmem [thread:$0]  %s0, 256, %s19, [#allocation4], 128, 128, 8
    $region5: #{tpu_custom_call.1} parent=1 // pred_fallthru
      _
    // Predicated region
    $region6: #{tpu_custom_call.1} parent=1 // pred_check
      _
    $region7: #{tpu_custom_call.1} parent=1 // pred_check_branch
      %26 = sbr.rel (0) target = $region9
    $region8: #{tpu_custom_call.1} parent=1 // pred_region
      %s28 = ssub.s32 2048, 2048
      %29 = vsyncadd [#allocation7], %s28
      %s30 = sshll.u32 [#allocation6], 4
      %s31 = int_to_ptr.vmem [resolvable:$true] %s30
      %36 = dma.hbm_to_vmem [thread:$0]  %s1, 2048, %s31, [#allocation7], 128, 128, 8
    $region9: #{tpu_custom_call.1} parent=1 // pred_fallthru
      _
    // Predicated region
    $region10: #{tpu_custom_call.1} parent=1 // pred_check
      _
    $region11: #{tpu_custom_call.1} parent=1 // pred_check_branch
      %38 = sbr.rel (0) target = $region13
    $region12: #{tpu_custom_call.1} parent=1 // pred_region
      _
    $region13: #{tpu_custom_call.1} parent=1 // pred_fallthru
      _
    // Predicated region
    $region14: #{tpu_custom_call.1} parent=1 // pred_check
      _
    $region15: #{tpu_custom_call.1} parent=1 // pred_check_branch
      %40 = sbr.rel (0) target = $region17
    $region16: #{tpu_custom_call.1} parent=1 // pred_region
      _
    $region17: #{tpu_custom_call.1} parent=1 // pred_fallthru
      _
    // Predicated region
    $region18: #{tpu_custom_call.1} parent=1 // pred_check
      _
    $region19: #{tpu_custom_call.1} parent=1 // pred_check_branch
      %42 = sbr.rel (0) target = $region21
    $region20: #{tpu_custom_call.1} parent=1 // pred_region
      _
    $region21: #{tpu_custom_call.1} parent=1 // pred_fallthru
      _
    // Predicated region
    $region22: #{tpu_custom_call.1} parent=1 // pred_check
      _
    $region23: #{tpu_custom_call.1} parent=1 // pred_check_branch
      %44 = sbr.rel (0) target = $region25
    $region24: #{tpu_custom_call.1} parent=1 // pred_region
      %45 = dma.done [#allocation4], 256
    $region25: #{tpu_custom_call.1} parent=1 // pred_fallthru
      _
    // Predicated region
    $region26: #{tpu_custom_call.1} parent=1 // pred_check
      _
    $region27: #{tpu_custom_call.1} parent=1 // pred_check_branch
      %47 = sbr.rel (0) target = $region29
    $region28: #{tpu_custom_call.1} parent=1 // pred_region
      %48 = dma.done [#allocation7], 2048
    $region29: #{tpu_custom_call.1} parent=1 // pred_fallthru
      _
    %p49 = scmp.eq.s32.totalorder 0, 0
    // Predicated region
    $region30: #{tpu_custom_call.1} parent=1 // pred_check
      %p50 = pneg %p49
    $region31: #{tpu_custom_call.1} parent=1 // pred_check_branch
      %52 = sbr.rel (%p50) target = $region33
    $region32: #{tpu_custom_call.1} parent=1 // pred_region
      %v53 = vld [vmem:[%s2] sm:$0x1]
      %v55 = vlaneseq
      %v56 = vshrl.u32 %v55, 7
      %v57 = vsub.s32 0, %v56
      %v58 = vrot.slane %v53, %v57
      %60 = vst [vmem:[#allocation2] sm:$0xff] %v58
      %61 = vst [vmem:[#allocation2 + $0x8] sm:$0xff] %v58
    $region33: #{tpu_custom_call.1} parent=1 // pred_fallthru
      _
    %v62 = vld [vmem:[#allocation2] sm:$0xff]
    %v63 = vld [vmem:[#allocation2 + $0x8] sm:$0xff]
    %v64 = vld [vmem:[#allocation3] sm:$0xff]
    %v65 = vld [vmem:[#allocation3 + $0x8] sm:$0xff]
    %v66 = vld [vmem:[#allocation6] sm:$0xff]
    %v67 = vld [vmem:[#allocation6 + $0x8] sm:$0xff]
    %v68 = vld [vmem:[#allocation6 + $0x10] sm:$0xff]
    %v69 = vld [vmem:[#allocation6 + $0x18] sm:$0xff]
    %v70 = vld [vmem:[#allocation6 + $0x20] sm:$0xff]
    %v71 = vld [vmem:[#allocation6 + $0x28] sm:$0xff]
    %v72 = vld [vmem:[#allocation6 + $0x30] sm:$0xff]
    %v73 = vld [vmem:[#allocation6 + $0x38] sm:$0xff]
    %v74 = vld [vmem:[#allocation6 + $0x40] sm:$0xff]
    %v75 = vld [vmem:[#allocation6 + $0x48] sm:$0xff]
    %v76 = vld [vmem:[#allocation6 + $0x50] sm:$0xff]
    %v77 = vld [vmem:[#allocation6 + $0x58] sm:$0xff]
    %v78 = vld [vmem:[#allocation6 + $0x60] sm:$0xff]
    %v79 = vld [vmem:[#allocation6 + $0x68] sm:$0xff]
    %v80 = vld [vmem:[#allocation6 + $0x70] sm:$0xff]
    %v81 = vld [vmem:[#allocation6 + $0x78] sm:$0xff]
    %82 = vmatprep.subr.mxu0 0.0
    %83 = vmatpush1.msra.mxu0 %v66
    %84 = vmatprep.subr.mxu0 0.0
    %85 = vmatpush1.msra.mxu0 %v67
    %86 = vmatprep.subr.mxu0 0.0
    %87 = vmatpush1.msra.mxu0 %v68
    %88 = vmatprep.subr.mxu0 0.0
    %89 = vmatpush1.msra.mxu0 %v69
    %90 = vmatprep.subr.mxu0 0.0
    %91 = vmatpush1.msra.mxu0 %v70
    %92 = vmatprep.subr.mxu0 0.0
    %93 = vmatpush1.msra.mxu0 %v71
    %94 = vmatprep.subr.mxu0 0.0
    %95 = vmatpush1.msra.mxu0 %v72
    %96 = vmatprep.subr.mxu0 0.0
    %97 = vmatpush1.msra.mxu0 %v73
    %98 = vmatprep.subr.mxu0 0.0
    %99 = vmatpush1.msra.mxu0 %v74
    %100 = vmatprep.subr.mxu0 0.0
    %101 = vmatpush1.msra.mxu0 %v75
    %102 = vmatprep.subr.mxu0 0.0
    %103 = vmatpush1.msra.mxu0 %v76
    %104 = vmatprep.subr.mxu0 0.0
    %105 = vmatpush1.msra.mxu0 %v77
    %106 = vmatprep.subr.mxu0 0.0
    %107 = vmatpush1.msra.mxu0 %v78
    %108 = vmatprep.subr.mxu0 0.0
    %109 = vmatpush1.msra.mxu0 %v79
    %110 = vmatprep.subr.mxu0 0.0
    %111 = vmatpush1.msra.mxu0 %v80
    %112 = vmatprep.subr.mxu0 0.0
    %113 = vmatpush1.msra.mxu0 %v81
    %114 = vmatprep.subr.mxu0 0.0
    %115 = vmatpush1.msra.mxu0 0.0
    %116 = vmatprep.subr.mxu0 0.0
    %117 = vmatpush1.msra.mxu0 0.0
    %118 = vmatprep.subr.mxu0 0.0
    %119 = vmatpush1.msra.mxu0 0.0
    %120 = vmatprep.subr.mxu0 0.0
    %121 = vmatpush1.msra.mxu0 0.0
    %122 = vmatprep.subr.mxu0 0.0
    %123 = vmatpush1.msra.mxu0 0.0
    %124 = vmatprep.subr.mxu0 0.0
    %125 = vmatpush1.msra.mxu0 0.0
    %126 = vmatprep.subr.mxu0 0.0
    %127 = vmatpush1.msra.mxu0 0.0
    %128 = vmatprep.subr.mxu0 0.0
    %129 = vmatpush1.msra.mxu0 0.0
    %130 = vmatprep.subr.mxu0 0.0
    %131 = vmatpush1.msra.mxu0 0.0
    %132 = vmatprep.subr.mxu0 0.0
    %133 = vmatpush1.msra.mxu0 0.0
    %134 = vmatprep.subr.mxu0 0.0
    %135 = vmatpush1.msra.mxu0 0.0
    %136 = vmatprep.subr.mxu0 0.0
    %137 = vmatpush1.msra.mxu0 0.0
    %138 = vmatprep.subr.mxu0 0.0
    %139 = vmatpush1.msra.mxu0 0.0
    %140 = vmatprep.subr.mxu0 0.0
    %141 = vmatpush1.msra.mxu0 0.0
    %142 = vmatprep.subr.mxu0 0.0
    %143 = vmatpush1.msra.mxu0 0.0
    %144 = vmatprep.subr.mxu0 0.0
    %145 = vmatpush1.msra.mxu0 0.0
    %146 = vmatprep.mubr.f32.mxu0 0.0
    %147 = vmatmul.mubr.f32.gmra.mrb[0].mxu0 %v64
    %v148 = vpop.f32.mrb[0].mxu0
    %v149 = vadd.f32 0.0, %v148
    %v150 = vpop.f32.mrb[0].mxu0
    %151 = vmatprep.mubr.f32.mxu0 0.0
    %152 = vmatmul.mubr.f32.gmra.mrb[0].mxu0 %v65
    %v153 = vpop.f32.mrb[0].mxu0
    %v154 = vadd.f32 0.0, %v153
    %v155 = vpop.f32.mrb[0].mxu0
    %156 = vdwg.mxu0
    %v157 = vadd.f32 %v62, %v149
    %v158 = vadd.f32 %v63, %v154
    %159 = vst [vmem:[#allocation2] sm:$0xff] %v157
    %160 = vst [vmem:[#allocation2 + $0x8] sm:$0xff] %v158
    // Predicated region
    $region34: #{tpu_custom_call.1} parent=1 // pred_check
      %p161 = pneg %p49
    $region35: #{tpu_custom_call.1} parent=1 // pred_check_branch
      %163 = sbr.rel (%p161) target = $region37
    $region36: #{tpu_custom_call.1} parent=1 // pred_region
      %v164 = vld [vmem:[#allocation2] sm:$0xff]
      %v165 = vld [vmem:[#allocation2 + $0x8] sm:$0xff]
      %166 = vadd.xlane.f32.xlu0 %v164
      %v167 = vpop.xlane.xlu0 %166
      %168 = vadd.xlane.f32.xlu0 %v165
      %v169 = vpop.xlane.xlu0 %168
      %v170 = vmul.f32 %v167, 0.03125
      %v171 = vmul.f32 %v169, 0.03125
      %v172 = vsub.f32 %v164, %v170
      %v173 = vsub.f32 %v165, %v171
      %v174 = vlaneseq
      %v175 = vand.u32 %v174, 127
      %vm176 = vcmp.lt.s32.totalorder %v175, 32
      %v177 = vsel %vm176, %v172, 0.0
      %v178 = vsel %vm176, %v173, 0.0
      %v179 = vmul.f32 %v177, %v177
      %v180 = vmul.f32 %v178, %v178
      %181 = vadd.xlane.f32.xlu0 %v179
      %v182 = vpop.xlane.xlu0 %181
      %183 = vadd.xlane.f32.xlu0 %v180
      %v184 = vpop.xlane.xlu0 %183
      %v185 = vmul.f32 %v182, 0.03125
      %v186 = vmul.f32 %v184, 0.03125
      %v187 = vadd.f32 %v185, 1e-05
      %v188 = vadd.f32 %v186, 1e-05
      %v189 = vrsqrt.pop %v187
      %v190 = vrsqrt.pop %v188
      %v191 = vmul.f32 %v177, %v189
      %v192 = vmul.f32 %v178, %v190
      %v193 = vld [vmem:[%s3] sm:$0x1]
      %v195 = vlaneseq
      %v196 = vshrl.u32 %v195, 7
      %v197 = vsub.s32 0, %v196
      %v198 = vrot.slane %v193, %v197
      %v200 = vmul.f32 %v191, %v198
      %v201 = vmul.f32 %v192, %v198
      %v202 = vld [vmem:[%s4] sm:$0x1]
      %v204 = vlaneseq
      %v205 = vshrl.u32 %v204, 7
      %v206 = vsub.s32 0, %v205
      %v207 = vrot.slane %v202, %v206
      %v209 = vadd.f32 %v200, %v207
      %v210 = vadd.f32 %v201, %v207
      %211 = vst [vmem:[#allocation8] sm:$0xff] %v209
      %212 = vst [vmem:[#allocation8 + $0x8] sm:$0xff] %v210
    $region37: #{tpu_custom_call.1} parent=1 // pred_fallthru
      _
    // Predicated region
    $region38: #{tpu_custom_call.1} parent=1 // pred_check
      _
    $region39: #{tpu_custom_call.1} parent=1 // pred_check_branch
      %214 = sbr.rel (0) target = $region41
    $region40: #{tpu_custom_call.1} parent=1 // pred_region
      %s216 = ssub.s32 256, 256
      %217 = vsyncadd [#allocation5], %s216
      %s218 = sshll.u32 [#allocation8], 4
      %s219 = int_to_ptr.vmem [resolvable:$true] %s218
      %224 = dma.vmem_to_hbm [thread:$0]  %s219, 256, %s5, [#allocation5], 128, 128, 8
    $region41: #{tpu_custom_call.1} parent=1 // pred_fallthru
      _
    // Predicated region
    $region42: #{tpu_custom_call.1} parent=1 // pred_check
      _
    $region43: #{tpu_custom_call.1} parent=1 // pred_check_branch
      %226 = sbr.rel (0) target = $region45
    $region44: #{tpu_custom_call.1} parent=1 // pred_region
      %227 = dma.done [#allocation5], 256
    $region45: #{tpu_custom_call.1} parent=1 // pred_fallthru
      _
    %228 = vsyncpa [#allocation4], 1
    %229 = vsyncpa [#allocation7], 1
    %230 = vsyncpa [#allocation5], 1

// kernel: tpu_custom_call.1
$region0: #{tpu_custom_call.1}
  #allocation0 [shape = 'u32[]', space=smem, size = 0x4, offset = 0x4, fixed_abs, tag = 'smem constant byte address 0x4 - core index']
  #allocation1 [shape = 'u32[144,128]{1,0:T(1,128)}', space=vmem, size = 0x12000, scoped, tag = 'internal scratch']
  #allocation2 [shape = 'f32[16,128]{1,0:T(8,128)}', space=vmem, size = 0x2000, scoped, tag = 'scratch operand']
  %s0 = inlined_call_operand.hbm [shape: f32[16,128], index: 0, kind: input, shape index: {}]
  %s1 = inlined_call_operand.hbm [shape: f32[128,128], index: 1, kind: input, shape index: {}]
  %s2 = inlined_call_operand.vmem [shape: f32[1,128], index: 2, kind: input, shape index: {}]
  %s3 = inlined_call_operand.vmem [shape: f32[1,128], index: 3, kind: input, shape index: {}]
  %s4 = inlined_call_operand.vmem [shape: f32[1,128], index: 4, kind: input, shape index: {}]
  %s5 = inlined_call_operand.hbm [shape: f32[16,128], index: 5, kind: output, shape index: {}]
  %s6 = sld [smem:[#allocation0]]
  $region46: #{tpu_custom_call.1} parent=0
    _
  %s8 = ssub.s32 1, %s6
  %s9 = scalar_select 0, %s8, %s6
  $region1: #{tpu_custom_call.1} parent=0
    #allocation3 [shape = 'u8[8192]{0}', space=vmem, size = 0x2000, scoped, tag = 'input window, operand 0, single buffered']
    #allocation4 [shape = 's32[1]{0}', space=sflag, size = 0x4, scoped, tag = 'scoped memory for tpu_custom_call.1']
    #allocation5 [shape = 's32[1]{0}', space=sflag, size = 0x4, scoped, tag = 'scoped memory for tpu_custom_call.1']
    #allocation6 [shape = 'u8[65536]{0}', space=vmem, size = 0x10000, scoped, tag = 'input window, operand 1, single buffered']
    #allocation7 [shape = 's32[1]{0}', space=sflag, size = 0x4, scoped, tag = 'scoped memory for tpu_custom_call.1']
    #allocation8 [shape = 'u8[8192]{0}', space=vmem, size = 0x2000, scoped, tag = 'output window, operand 0, single buffered']
    %10 = vsyncpa [#allocation4], 0
    %11 = vsyncpa [#allocation7], 0
    %12 = vsyncpa [#allocation5], 0
    // Predicated region
    $region2: #{tpu_custom_call.1} parent=1 // pred_check
      _
    $region3: #{tpu_custom_call.1} parent=1 // pred_check_branch
      %14 = sbr.rel (0) target = $region5
    $region4: #{tpu_custom_call.1} parent=1 // pred_region
      %s16 = ssub.s32 256, 256
      %17 = vsyncadd [#allocation4], %s16
      %s18 = sshll.u32 [#allocation3], 4
      %s19 = int_to_ptr.vmem [resolvable:$true] %s18
      %24 = dma.hbm_to_vmem [thread:$0]  %s0, 256, %s19, [#allocation4], 128, 128, 8
    $region5: #{tpu_custom_call.1} parent=1 // pred_fallthru
      _
    // Predicated region
    $region6: #{tpu_custom_call.1} parent=1 // pred_check
      _
    $region7: #{tpu_custom_call.1} parent=1 // pred_check_branch
      %26 = sbr.rel (0) target = $region9
    $region8: #{tpu_custom_call.1} parent=1 // pred_region
      %s28 = ssub.s32 2048, 2048
      %29 = vsyncadd [#allocation7], %s28
      %s30 = sshll.u32 [#allocation6], 4
      %s31 = int_to_ptr.vmem [resolvable:$true] %s30
      %36 = dma.hbm_to_vmem [thread:$0]  %s1, 2048, %s31, [#allocation7], 128, 128, 8
    $region9: #{tpu_custom_call.1} parent=1 // pred_fallthru
      _
    // Predicated region
    $region10: #{tpu_custom_call.1} parent=1 // pred_check
      _
    $region11: #{tpu_custom_call.1} parent=1 // pred_check_branch
      %38 = sbr.rel (0) target = $region13
    $region12: #{tpu_custom_call.1} parent=1 // pred_region
      _
    $region13: #{tpu_custom_call.1} parent=1 // pred_fallthru
      _
    // Predicated region
    $region14: #{tpu_custom_call.1} parent=1 // pred_check
      _
    $region15: #{tpu_custom_call.1} parent=1 // pred_check_branch
      %40 = sbr.rel (0) target = $region17
    $region16: #{tpu_custom_call.1} parent=1 // pred_region
      _
    $region17: #{tpu_custom_call.1} parent=1 // pred_fallthru
      _
    // Predicated region
    $region18: #{tpu_custom_call.1} parent=1 // pred_check
      _
    $region19: #{tpu_custom_call.1} parent=1 // pred_check_branch
      %42 = sbr.rel (0) target = $region21
    $region20: #{tpu_custom_call.1} parent=1 // pred_region
      _
    $region21: #{tpu_custom_call.1} parent=1 // pred_fallthru
      _
    // Predicated region
    $region22: #{tpu_custom_call.1} parent=1 // pred_check
      _
    $region23: #{tpu_custom_call.1} parent=1 // pred_check_branch
      %44 = sbr.rel (0) target = $region25
    $region24: #{tpu_custom_call.1} parent=1 // pred_region
      %45 = dma.done [#allocation4], 256
    $region25: #{tpu_custom_call.1} parent=1 // pred_fallthru
      _
    // Predicated region
    $region26: #{tpu_custom_call.1} parent=1 // pred_check
      _
    $region27: #{tpu_custom_call.1} parent=1 // pred_check_branch
      %47 = sbr.rel (0) target = $region29
    $region28: #{tpu_custom_call.1} parent=1 // pred_region
      %48 = dma.done [#allocation7], 2048
    $region29: #{tpu_custom_call.1} parent=1 // pred_fallthru
      _
    %p49 = scmp.eq.s32.totalorder 0, 0
    // Predicated region
    $region30: #{tpu_custom_call.1} parent=1 // pred_check
      %p50 = pneg %p49
    $region31: #{tpu_custom_call.1} parent=1 // pred_check_branch
      %52 = sbr.rel (%p50) target = $region33
    $region32: #{tpu_custom_call.1} parent=1 // pred_region
      %v53 = vld [vmem:[%s2] sm:$0x1]
      %v55 = vlaneseq
      %v56 = vshrl.u32 %v55, 7
      %v57 = vsub.s32 0, %v56
      %v58 = vrot.slane %v53, %v57
      %60 = vst [vmem:[#allocation2] sm:$0xff] %v58
      %61 = vst [vmem:[#allocation2 + $0x8] sm:$0xff] %v58
    $region33: #{tpu_custom_call.1} parent=1 // pred_fallthru
      _
    %v62 = vld [vmem:[#allocation2] sm:$0xff]
    %v63 = vld [vmem:[#allocation2 + $0x8] sm:$0xff]
    %v64 = vld [vmem:[#allocation3] sm:$0xff]
    %v65 = vld [vmem:[#allocation3 + $0x8] sm:$0xff]
    %v66 = vld [vmem:[#allocation6] sm:$0xff]
    %v67 = vld [vmem:[#allocation6 + $0x8] sm:$0xff]
    %v68 = vld [vmem:[#allocation6 + $0x10] sm:$0xff]
    %v69 = vld [vmem:[#allocation6 + $0x18] sm:$0xff]
    %v70 = vld [vmem:[#allocation6 + $0x20] sm:$0xff]
    %v71 = vld [vmem:[#allocation6 + $0x28] sm:$0xff]
    %v72 = vld [vmem:[#allocation6 + $0x30] sm:$0xff]
    %v73 = vld [vmem:[#allocation6 + $0x38] sm:$0xff]
    %v74 = vld [vmem:[#allocation6 + $0x40] sm:$0xff]
    %v75 = vld [vmem:[#allocation6 + $0x48] sm:$0xff]
    %v76 = vld [vmem:[#allocation6 + $0x50] sm:$0xff]
    %v77 = vld [vmem:[#allocation6 + $0x58] sm:$0xff]
    %v78 = vld [vmem:[#allocation6 + $0x60] sm:$0xff]
    %v79 = vld [vmem:[#allocation6 + $0x68] sm:$0xff]
    %v80 = vld [vmem:[#allocation6 + $0x70] sm:$0xff]
    %v81 = vld [vmem:[#allocation6 + $0x78] sm:$0xff]
    %82 = vmatprep.subr.mxu0 0.0
    %83 = vmatpush1.msra.mxu0 %v66
    %84 = vmatprep.subr.mxu0 0.0
    %85 = vmatpush1.msra.mxu0 %v67
    %86 = vmatprep.subr.mxu0 0.0
    %87 = vmatpush1.msra.mxu0 %v68
    %88 = vmatprep.subr.mxu0 0.0
    %89 = vmatpush1.msra.mxu0 %v69
    %90 = vmatprep.subr.mxu0 0.0
    %91 = vmatpush1.msra.mxu0 %v70
    %92 = vmatprep.subr.mxu0 0.0
    %93 = vmatpush1.msra.mxu0 %v71
    %94 = vmatprep.subr.mxu0 0.0
    %95 = vmatpush1.msra.mxu0 %v72
    %96 = vmatprep.subr.mxu0 0.0
    %97 = vmatpush1.msra.mxu0 %v73
    %98 = vmatprep.subr.mxu0 0.0
    %99 = vmatpush1.msra.mxu0 %v74
    %100 = vmatprep.subr.mxu0 0.0
    %101 = vmatpush1.msra.mxu0 %v75
    %102 = vmatprep.subr.mxu0 0.0
    %103 = vmatpush1.msra.mxu0 %v76
    %104 = vmatprep.subr.mxu0 0.0
    %105 = vmatpush1.msra.mxu0 %v77
    %106 = vmatprep.subr.mxu0 0.0
    %107 = vmatpush1.msra.mxu0 %v78
    %108 = vmatprep.subr.mxu0 0.0
    %109 = vmatpush1.msra.mxu0 %v79
    %110 = vmatprep.subr.mxu0 0.0
    %111 = vmatpush1.msra.mxu0 %v80
    %112 = vmatprep.subr.mxu0 0.0
    %113 = vmatpush1.msra.mxu0 %v81
    %114 = vmatprep.subr.mxu0 0.0
    %115 = vmatpush1.msra.mxu0 0.0
    %116 = vmatprep.subr.mxu0 0.0
    %117 = vmatpush1.msra.mxu0 0.0
    %118 = vmatprep.subr.mxu0 0.0
    %119 = vmatpush1.msra.mxu0 0.0
    %120 = vmatprep.subr.mxu0 0.0
    %121 = vmatpush1.msra.mxu0 0.0
    %122 = vmatprep.subr.mxu0 0.0
    %123 = vmatpush1.msra.mxu0 0.0
    %124 = vmatprep.subr.mxu0 0.0
    %125 = vmatpush1.msra.mxu0 0.0
    %126 = vmatprep.subr.mxu0 0.0
    %127 = vmatpush1.msra.mxu0 0.0
    %128 = vmatprep.subr.mxu0 0.0
    %129 = vmatpush1.msra.mxu0 0.0
    %130 = vmatprep.subr.mxu0 0.0
    %131 = vmatpush1.msra.mxu0 0.0
    %132 = vmatprep.subr.mxu0 0.0
    %133 = vmatpush1.msra.mxu0 0.0
    %134 = vmatprep.subr.mxu0 0.0
    %135 = vmatpush1.msra.mxu0 0.0
    %136 = vmatprep.subr.mxu0 0.0
    %137 = vmatpush1.msra.mxu0 0.0
    %138 = vmatprep.subr.mxu0 0.0
    %139 = vmatpush1.msra.mxu0 0.0
    %140 = vmatprep.subr.mxu0 0.0
    %141 = vmatpush1.msra.mxu0 0.0
    %142 = vmatprep.subr.mxu0 0.0
    %143 = vmatpush1.msra.mxu0 0.0
    %144 = vmatprep.subr.mxu0 0.0
    %145 = vmatpush1.msra.mxu0 0.0
    %146 = vmatprep.mubr.f32.mxu0 0.0
    %147 = vmatmul.mubr.f32.gmra.mrb[0].mxu0 %v64
    %v148 = vpop.f32.mrb[0].mxu0
    %v149 = vadd.f32 0.0, %v148
    %v150 = vpop.f32.mrb[0].mxu0
    %151 = vmatprep.mubr.f32.mxu0 0.0
    %152 = vmatmul.mubr.f32.gmra.mrb[0].mxu0 %v65
    %v153 = vpop.f32.mrb[0].mxu0
    %v154 = vadd.f32 0.0, %v153
    %v155 = vpop.f32.mrb[0].mxu0
    %156 = vdwg.mxu0
    %v157 = vadd.f32 %v62, %v149
    %v158 = vadd.f32 %v63, %v154
    %159 = vst [vmem:[#allocation2] sm:$0xff] %v157
    %160 = vst [vmem:[#allocation2 + $0x8] sm:$0xff] %v158
    // Predicated region
    $region34: #{tpu_custom_call.1} parent=1 // pred_check
      %p161 = pneg %p49
    $region35: #{tpu_custom_call.1} parent=1 // pred_check_branch
      %163 = sbr.rel (%p161) target = $region37
    $region36: #{tpu_custom_call.1} parent=1 // pred_region
      %v164 = vld [vmem:[#allocation2] sm:$0xff]
      %v165 = vld [vmem:[#allocation2 + $0x8] sm:$0xff]
      %166 = vadd.xlane.f32.xlu0 %v164
      %v167 = vpop.xlane.xlu0 %166
      %168 = vadd.xlane.f32.xlu0 %v165
      %v169 = vpop.xlane.xlu0 %168
      %v170 = vmul.f32 %v167, 0.03125
      %v171 = vmul.f32 %v169, 0.03125
      %v172 = vsub.f32 %v164, %v170
      %v173 = vsub.f32 %v165, %v171
      %v174 = vlaneseq
      %v175 = vand.u32 %v174, 127
      %vm176 = vcmp.lt.s32.totalorder %v175, 32
      %v177 = vsel %vm176, %v172, 0.0
      %v178 = vsel %vm176, %v173, 0.0
      %v179 = vmul.f32 %v177, %v177
      %v180 = vmul.f32 %v178, %v178
      %181 = vadd.xlane.f32.xlu0 %v179
      %v182 = vpop.xlane.xlu0 %181
      %183 = vadd.xlane.f32.xlu0 %v180
      %v184 = vpop.xlane.xlu0 %183
      %v185 = vmul.f32 %v182, 0.03125
      %v186 = vmul.f32 %v184, 0.03125
      %v187 = vadd.f32 %v185, 1e-05
      %v188 = vadd.f32 %v186, 1e-05
      %v189 = vrsqrt.pop %v187
      %v190 = vrsqrt.pop %v188
      %v191 = vmul.f32 %v177, %v189
      %v192 = vmul.f32 %v178, %v190
      %v193 = vld [vmem:[%s3] sm:$0x1]
      %v195 = vlaneseq
      %v196 = vshrl.u32 %v195, 7
      %v197 = vsub.s32 0, %v196
      %v198 = vrot.slane %v193, %v197
      %v200 = vmul.f32 %v191, %v198
      %v201 = vmul.f32 %v192, %v198
      %v202 = vld [vmem:[%s4] sm:$0x1]
      %v204 = vlaneseq
      %v205 = vshrl.u32 %v204, 7
      %v206 = vsub.s32 0, %v205
      %v207 = vrot.slane %v202, %v206
      %v209 = vadd.f32 %v200, %v207
      %v210 = vadd.f32 %v201, %v207
      %211 = vst [vmem:[#allocation8] sm:$0xff] %v209
      %212 = vst [vmem:[#allocation8 + $0x8] sm:$0xff] %v210
    $region37: #{tpu_custom_call.1} parent=1 // pred_fallthru
      _
    // Predicated region
    $region38: #{tpu_custom_call.1} parent=1 // pred_check
      _
    $region39: #{tpu_custom_call.1} parent=1 // pred_check_branch
      %214 = sbr.rel (0) target = $region41
    $region40: #{tpu_custom_call.1} parent=1 // pred_region
      %s216 = ssub.s32 256, 256
      %217 = vsyncadd [#allocation5], %s216
      %s218 = sshll.u32 [#allocation8], 4
      %s219 = int_to_ptr.vmem [resolvable:$true] %s218
      %224 = dma.vmem_to_hbm [thread:$0]  %s219, 256, %s5, [#allocation5], 128, 128, 8
    $region41: #{tpu_custom_call.1} parent=1 // pred_fallthru
      _
    // Predicated region
    $region42: #{tpu_custom_call.1} parent=1 // pred_check
      _
    $region43: #{tpu_custom_call.1} parent=1 // pred_check_branch
      %226 = sbr.rel (0) target = $region45
    $region44: #{tpu_custom_call.1} parent=1 // pred_region
      %227 = dma.done [#allocation5], 256
    $region45: #{tpu_custom_call.1} parent=1 // pred_fallthru
      _
    %228 = vsyncpa [#allocation4], 1
    %229 = vsyncpa [#allocation7], 1
    %230 = vsyncpa [#allocation5], 1

</llo_original>
